<compile_context>
chip_gen: v7x
topology: tpu7x:2x2x1
jax: 0.10.0
libtpu: 0.0.40
codegen_flags: <defaults>
</compile_context>

<pallas_src>
import functools
import math

import jax
import jax.numpy as jnp
from jax.experimental import pallas as pl
from jax.experimental.pallas import tpu as pltpu


_FALLBACK_BUDGET = (4 * 1024 * 1024, 32 * 1024 * 1024)   # (tile bytes, vmem limit)
_budget_cache = None


def _hw_budgets():
    """(target row-tile bytes, scoped-VMEM limit) chosen per TPU generation."""
    global _budget_cache
    if _budget_cache is None:
        try:
            vmem = int(getattr(pltpu.get_tpu_info(), "vmem_capacity_bytes", 0))
        except Exception:
            vmem = 0
        if vmem >= 100 * 1024 * 1024:          # v5e / v6e: 128 MiB VMEM
            _budget_cache = (12 * 1024 * 1024, 80 * 1024 * 1024)
        elif vmem > 0:                          # v7x: 64 MiB VMEM per TC
            _budget_cache = (6 * 1024 * 1024, 48 * 1024 * 1024)
        else:                                   # unknown / emulator
            _budget_cache = _FALLBACK_BUDGET
    return _budget_cache


def _sublane_pack(itemsize):
    """Sublane packing factor per dtype width (f32:8, bf16:16, int8/fp8:32)."""
    return {4: 8, 2: 16, 1: 32}.get(itemsize, 8)


def _pick_tile_rows(m, row_bytes, pack, target_bytes):
    """Rows per block: a multiple of the sublane pack when possible (so both
    passes see sublane-aligned tiles), else the full extent (tiny inputs)."""
    if m <= pack:
        return m
    tile = max(pack, (target_bytes // max(row_bytes, 1)) // pack * pack)
    return min(tile, (m // pack) * pack)


def _densify_factor(m, l):
    """Merge k consecutive rows into one so the lane width k*l is a multiple
    of 128 (ideally >= 512) -> lane-dense loads/stores in both passes."""
    if l % 128 == 0 and l >= 512:
        return 1
    g = 1 if l % 128 == 0 else 128 // math.gcd(l, 128)
    best = 1 if l % 128 == 0 else None
    k = g
    limit = min(m, 8192)
    while k <= limit:
        if m % k == 0:
            best = k
            if k * l >= 512:
                break
        k += g
    return best if best is not None else 1


def _stats_kernel(x_ref, sum_ref, sq_ref, *, rows_total, tile_rows,
                  tiles_per_split, num_full_tiles, has_tail, fold8):
    """Pass 1: per-lane sum / sum-of-squares into (8, L) f32 accumulators that
    stay VMEM-resident across the inner ("arbitrary") grid axis.  The leading
    ("parallel") axis splits the row range across v7x's two TensorCores."""
    i = pl.program_id(1)

    @pl.when(i == 0)
    def _init():
        sum_ref[...] = jnp.zeros_like(sum_ref)
        sq_ref[...] = jnp.zeros_like(sq_ref)

    def _accum(x):
        if fold8:
            # Sublane-aligned fold: pure VPU vreg adds, no XLU reduction and no
            # masked single-sublane accumulator updates.
            xs = x.reshape(tile_rows // 8, 8, x.shape[-1])
            sum_ref[...] += jnp.sum(xs, axis=0)
            sq_ref[...] += jnp.sum(xs * xs, axis=0)
        else:
            # Tiny / oddly-shaped tile: single fold into sublane 0.
            sum_ref[0:1, :] += jnp.sum(x, axis=0, keepdims=True)
            sq_ref[0:1, :] += jnp.sum(x * x, axis=0, keepdims=True)

    if has_tail:
        t = pl.program_id(0) * tiles_per_split + i

        @pl.when(t < num_full_tiles)
        def _full_tile():                      # fast path: no masking at all
            _accum(x_ref[...].astype(jnp.float32))

        @pl.when(t >= num_full_tiles)
        def _tail_tile():                      # ragged / padded tiles only
            x = x_ref[...].astype(jnp.float32)
            row = jax.lax.broadcasted_iota(jnp.int32, x.shape, 0) + t * tile_rows
            _accum(jnp.where(row < rows_total, x, 0.0))
    else:
        _accum(x_ref[...].astype(jnp.float32))


def _norm_kernel(x_ref, scale_ref, shift_ref, o_ref):
    """Pass 2: y = x * scale + shift with precomputed per-lane scale/shift."""
    x = x_ref[...].astype(jnp.float32)
    o_ref[...] = (x * scale_ref[...] + shift_ref[...]).astype(o_ref.dtype)


def _bn_slab(x2d, gamma, beta, eps, n_channels, spatial, *,
             target_block_bytes=None):
    """Per-channel batch norm on an (M, C*spatial) slab (biased variance,
    training mode).  Channel c owns lanes [c*spatial, (c+1)*spatial)."""
    m, l = x2d.shape
    itemsize = jnp.dtype(x2d.dtype).itemsize
    target, vmem_limit = _hw_budgets()
    if target_block_bytes is not None:
        target = target_block_bytes

    # Lane densification: fold k rows into one so lanes are 128-aligned.
    k = _densify_factor(m, l)
    m2, l2 = m // k, l * k
    xs = x2d.reshape(m2, l2) if k != 1 else x2d

    pack = _sublane_pack(itemsize)
    tile = _pick_tile_rows(m2, l2 * itemsize, pack, target)
    n_tiles = int(pl.cdiv(m2, tile))

    # Split the row range in two so v7x's dual TensorCores each own half of
    # pass 1; on v5e/v6e (1 TC) this is just a harmless outer loop of size 2.
    n_split = 2 if n_tiles >= 4 else 1
    tiles_per_split = int(pl.cdiv(n_tiles, n_split))
    n_tiles_padded = n_split * tiles_per_split
    num_full_tiles = m2 // tile                  # fully-valid, unmasked tiles
    has_tail = num_full_tiles != n_tiles_padded
    fold8 = (tile % 8 == 0) and (l2 % 128 == 0)

    def x_index(c, i):
        t = c * tiles_per_split + i
        if n_tiles_padded != n_tiles:
            # Padded tiles re-read the last real block; the kernel masks them
            # to zero so they contribute nothing.
            t = jnp.minimum(t, n_tiles - 1)
        return (t, 0)

    x_stats_spec = pl.BlockSpec((tile, l2), x_index)
    acc_spec = pl.BlockSpec((None, 8, l2), lambda c, i: (c, 0, 0))

    stats_kernel = functools.partial(
        _stats_kernel, rows_total=m2, tile_rows=tile,
        tiles_per_split=tiles_per_split, num_full_tiles=num_full_tiles,
        has_tail=has_tail, fold8=fold8)

    sums, sumsqs = pl.pallas_call(
        stats_kernel,
        out_shape=(jax.ShapeDtypeStruct((n_split, 8, l2), jnp.float32),
                   jax.ShapeDtypeStruct((n_split, 8, l2), jnp.float32)),
        grid=(n_split, tiles_per_split),
        in_specs=[x_stats_spec],
        out_specs=(acc_spec, acc_spec),
        compiler_params=pltpu.CompilerParams(
            dimension_semantics=("parallel", "arbitrary"),
            vmem_limit_bytes=vmem_limit),
        cost_estimate=pl.CostEstimate(
            flops=3 * m * l, transcendentals=0,
            bytes_accessed=m * l * itemsize + 2 * n_split * 8 * l2 * 4),
    )(xs)

    # Tiny per-channel finalize in plain JAX (only (n_split*8, L)-sized
    # partials): fold into per-channel mean/var, precompute per-lane rows.
    # TODO(synk): could be fused into pass 2 (VMEM scratch) to drop a dispatch,
    # but a pl.when(i==0) scratch init is unsafe once pass 2 is sharded across
    # TensorCores; kept as a separate tiny XLA op.
    # TODO(synk): E[x^2]-E[x]^2 in f32 can cancel for huge T*B with |mean|>>std;
    # fine for spike-valued activations.
    count = jnp.float32(m * spatial)
    ch_sum = jnp.sum(sums.reshape(-1, k, n_channels, spatial), axis=(0, 1, 3))
    ch_sq = jnp.sum(sumsqs.reshape(-1, k, n_channels, spatial), axis=(0, 1, 3))
    mean = ch_sum / count
    var = jnp.maximum(ch_sq / count - mean * mean, 0.0)   # biased (training) var
    inv_std = jax.lax.rsqrt(var + jnp.float32(eps))
    scale_c = gamma.astype(jnp.float32) * inv_std          # (C,)
    shift_c = beta.astype(jnp.float32) - mean * scale_c    # (C,)
    scale = jnp.broadcast_to(scale_c[None, :, None],
                             (k, n_channels, spatial)).reshape(1, l2)
    shift = jnp.broadcast_to(shift_c[None, :, None],
                             (k, n_channels, spatial)).reshape(1, l2)

    x_norm_spec = pl.BlockSpec((tile, l2), lambda i: (i, 0))
    row_spec = pl.BlockSpec((1, l2), lambda i: (0, 0))

    out = pl.pallas_call(
        _norm_kernel,
        out_shape=jax.ShapeDtypeStruct((m2, l2), x2d.dtype),
        grid=(n_tiles,),
        in_specs=[x_norm_spec, row_spec, row_spec],
        out_specs=x_norm_spec,
        compiler_params=pltpu.CompilerParams(
            dimension_semantics=("parallel",),   # shards across TCs on v7x
            vmem_limit_bytes=vmem_limit),
        cost_estimate=pl.CostEstimate(
            flops=2 * m * l, transcendentals=0,
            bytes_accessed=2 * m * l * itemsize + 2 * l2 * 4),
    )(xs, scale, shift)
    # NOTE: the last normalize tile may read rows past m2 (garbage lanes);
    # Pallas clamps/drops the out-of-range portion of the output write, so
    # those rows never reach HBM.  Keep in mind if this ever moves to manual
    # DMA.
    # TODO(synk): single-pass VMEM-resident fast path (stream x once, keep it
    # in VMEM, normalize from the copy) would cut HBM traffic 3x -> 2x for
    # small activations; not implemented here.
    return out.reshape(m, l) if k != 1 else out


def spike_batchnorm(x, gamma, beta, eps=1e-5):
    """Spiking-mode forward of SpikeBatchNorm.

    x: (T, B, C) or (T, B, C, W), channel axis = 2 (matching the PyTorch module).
    gamma, beta: (C,) affine parameters of the wrapped BatchNorm.
    """
    if x.ndim == 3:
        t, b, c = x.shape
        out = _bn_slab(x.reshape(t * b, c), gamma, beta, eps, c, 1)
        return out.reshape(t, b, c)
    elif x.ndim == 4:
        t, b, c, w = x.shape
        # (T, B, C, W) -> (T*B, C*W): contiguous merge of adjacent dims, no
        # transpose and no HBM round trip; channel c owns lanes [c*W, (c+1)*W).
        out = _bn_slab(x.reshape(t * b, c * w), gamma, beta, eps, c, w)
        return out.reshape(t, b, c, w)
    else:
        raise ValueError("expected 3D (T,B,C) or 4D (T,B,C,W) input")


def _reference_bn4d(x, gamma, beta, eps=1e-5):
    mean = jnp.mean(x, axis=(0, 1, 3), keepdims=True)
    var = jnp.mean((x - mean) ** 2, axis=(0, 1, 3), keepdims=True)
    g = gamma.reshape(1, 1, -1, 1)
    b = beta.reshape(1, 1, -1, 1)
    return (x - mean) / jnp.sqrt(var + eps) * g + b


def _reference_bn3d(x, gamma, beta, eps=1e-5):
    mean = jnp.mean(x, axis=(0, 1), keepdims=True)
    var = jnp.mean((x - mean) ** 2, axis=(0, 1), keepdims=True)
    return (x - mean) / jnp.sqrt(var + eps) * gamma.reshape(1, 1, -1) + beta.reshape(1, 1, -1)


if __name__ == "__main__":
    key = jax.random.PRNGKey(0)
    k_x4, k_x3, k_xs, k_g, k_b = jax.random.split(key, 5)

    # Small shapes: step T=2, batch B=2, num_features C=4, spatial W=16.
    T, B, C, W = 2, 2, 4, 16
    x4 = jax.random.normal(k_x4, (T, B, C, W), dtype=jnp.float32)
    x3 = jax.random.normal(k_x3, (T, B, C), dtype=jnp.float32)

    gamma = jax.random.uniform(k_g, (C,), jnp.float32, minval=0.5, maxval=1.5)
    beta = jax.random.normal(k_b, (C,), dtype=jnp.float32) * 0.1

    fwd = jax.jit(spike_batchnorm)
    out4 = jax.block_until_ready(fwd(x4, gamma, beta))
    out3 = jax.block_until_ready(fwd(x3, gamma, beta))

    ref4 = _reference_bn4d(x4, gamma, beta)
    ref3 = _reference_bn3d(x3, gamma, beta)

    assert out4.shape == x4.shape and out4.dtype == x4.dtype
    assert out3.shape == x3.shape and out3.dtype == x3.dtype
    assert jnp.allclose(out4, ref4, atol=1e-4, rtol=1e-4)
    assert jnp.allclose(out3, ref3, atol=1e-4, rtol=1e-4)

    # Exercise the multi-tile machinery (lane densification, dual-core split,
    # padded/ragged tail masking) cheaply by forcing a tiny row-tile budget.
    T2, B2, C2, W2 = 41, 50, 4, 16
    xs = jax.random.normal(k_xs, (T2, B2, C2, W2), dtype=jnp.float32)
    g2 = jnp.linspace(0.5, 1.5, C2, dtype=jnp.float32)
    b2 = jnp.linspace(-0.1, 0.1, C2, dtype=jnp.float32)
    out_s = jax.block_until_ready(
        _bn_slab(xs.reshape(T2 * B2, C2 * W2), g2, b2, 1e-5, C2, W2,
                 target_block_bytes=64 * 1024)).reshape(T2, B2, C2, W2)
    ref_s = _reference_bn4d(xs, g2, b2)
    assert jnp.allclose(out_s, ref_s, atol=5e-4, rtol=5e-4)

    print("KERNEL_OK")
</pallas_src>

<mosaic_0001>
module attributes {stable_mosaic.version = 11 : i64} {
  func.func @_stats_kernel(%arg0: i32, %arg1: i32, %arg2: memref<1x256xf32, #tpu.memory_space<vmem>>, %arg3: memref<1x8x256xf32, #tpu.memory_space<vmem>>, %arg4: memref<1x8x256xf32, #tpu.memory_space<vmem>>) attributes {dimension_semantics = [#tpu.dimension_semantics<parallel>, #tpu.dimension_semantics<arbitrary>], iteration_bounds = array<i64: 1, 1>, scalar_prefetch = 0 : i64, scratch_operands = 0 : i64, tpu.core_type = #tpu.core_type<tc>, window_params = [{transform_indices = @transform_0, window_bounds = array<i64: 1, 256>}, {transform_indices = @transform_1, window_bounds = array<i64: 1, 8, 256>}, {transform_indices = @transform_2, window_bounds = array<i64: 1, 8, 256>}]} {
    %c0_i32 = arith.constant 0 : i32
    %0 = arith.cmpi eq, %arg1, %c0_i32 : i32
    %1 = arith.extui %0 : i1 to i32
    %c0_i32_0 = arith.constant 0 : i32
    %2 = arith.cmpi ne, %1, %c0_i32_0 : i32
    scf.if %2 {
      %cst_15 = arith.constant 0.000000e+00 : f32
      %21 = vector.broadcast %cst_15 : f32 to vector<8x256xf32>
      %c0_16 = arith.constant 0 : index
      %c0_17 = arith.constant 0 : index
      %c0_18 = arith.constant 0 : index
      %22 = vector.load %arg3[%c0_16, %c0_17, %c0_18] : memref<1x8x256xf32, #tpu.memory_space<vmem>>, vector<1x8x256xf32>
      %23 = vector.shape_cast %22 : vector<1x8x256xf32> to vector<8x256xf32>
      %24 = vector.shape_cast %21 : vector<8x256xf32> to vector<1x8x256xf32>
      tpu.vector_store %arg3[%c0_16, %c0_17, %c0_18], %24 {strides = array<i32>} : memref<1x8x256xf32, #tpu.memory_space<vmem>>, vector<1x8x256xf32>,
      %cst_19 = arith.constant 0.000000e+00 : f32
      %25 = vector.broadcast %cst_19 : f32 to vector<8x256xf32>
      %c0_20 = arith.constant 0 : index
      %c0_21 = arith.constant 0 : index
      %c0_22 = arith.constant 0 : index
      %26 = vector.load %arg4[%c0_20, %c0_21, %c0_22] : memref<1x8x256xf32, #tpu.memory_space<vmem>>, vector<1x8x256xf32>
      %27 = vector.shape_cast %26 : vector<1x8x256xf32> to vector<8x256xf32>
      %28 = vector.shape_cast %25 : vector<8x256xf32> to vector<1x8x256xf32>
      tpu.vector_store %arg4[%c0_20, %c0_21, %c0_22], %28 {strides = array<i32>} : memref<1x8x256xf32, #tpu.memory_space<vmem>>, vector<1x8x256xf32>,
    } else {
    }
    %c0 = arith.constant 0 : index
    %c0_1 = arith.constant 0 : index
    %3 = vector.load %arg2[%c0, %c0_1] : memref<1x256xf32, #tpu.memory_space<vmem>>, vector<1x256xf32>
    %c0_2 = arith.constant 0 : index
    %c0_3 = arith.constant 0 : index
    %c0_4 = arith.constant 0 : index
    %4 = vector.load %arg3[%c0_2, %c0_3, %c0_4] : memref<1x8x256xf32, #tpu.memory_space<vmem>>, vector<1x1x256xf32>
    %5 = vector.shape_cast %4 : vector<1x1x256xf32> to vector<1x256xf32>
    %cst = arith.constant dense<0.000000e+00> : vector<256xf32>
    %6 = vector.multi_reduction <add>, %3, %cst [0] : vector<1x256xf32> to vector<256xf32>
    %7 = vector.shape_cast %6 : vector<256xf32> to vector<1x256xf32>
    %8 = arith.addf %5, %7 : vector<1x256xf32>
    %c0_5 = arith.constant 0 : index
    %c0_6 = arith.constant 0 : index
    %c0_7 = arith.constant 0 : index
    %9 = vector.load %arg3[%c0_5, %c0_6, %c0_7] : memref<1x8x256xf32, #tpu.memory_space<vmem>>, vector<1x1x256xf32>
    %10 = vector.shape_cast %9 : vector<1x1x256xf32> to vector<1x256xf32>
    %11 = vector.shape_cast %8 : vector<1x256xf32> to vector<1x1x256xf32>
    tpu.vector_store %arg3[%c0_5, %c0_6, %c0_7], %11 {strides = array<i32>} : memref<1x8x256xf32, #tpu.memory_space<vmem>>, vector<1x1x256xf32>,
    %c0_8 = arith.constant 0 : index
    %c0_9 = arith.constant 0 : index
    %c0_10 = arith.constant 0 : index
    %12 = vector.load %arg4[%c0_8, %c0_9, %c0_10] : memref<1x8x256xf32, #tpu.memory_space<vmem>>, vector<1x1x256xf32>
    %13 = vector.shape_cast %12 : vector<1x1x256xf32> to vector<1x256xf32>
    %14 = arith.mulf %3, %3 : vector<1x256xf32>
    %cst_11 = arith.constant dense<0.000000e+00> : vector<256xf32>
    %15 = vector.multi_reduction <add>, %14, %cst_11 [0] : vector<1x256xf32> to vector<256xf32>
    %16 = vector.shape_cast %15 : vector<256xf32> to vector<1x256xf32>
    %17 = arith.addf %13, %16 : vector<1x256xf32>
    %c0_12 = arith.constant 0 : index
    %c0_13 = arith.constant 0 : index
    %c0_14 = arith.constant 0 : index
    %18 = vector.load %arg4[%c0_12, %c0_13, %c0_14] : memref<1x8x256xf32, #tpu.memory_space<vmem>>, vector<1x1x256xf32>
    %19 = vector.shape_cast %18 : vector<1x1x256xf32> to vector<1x256xf32>
    %20 = vector.shape_cast %17 : vector<1x256xf32> to vector<1x1x256xf32>
    tpu.vector_store %arg4[%c0_12, %c0_13, %c0_14], %20 {strides = array<i32>} : memref<1x8x256xf32, #tpu.memory_space<vmem>>, vector<1x1x256xf32>,
    return
  }
  func.func @transform_0(%arg0: i32, %arg1: i32) -> (i32, i32) {
    %c1_i32 = arith.constant 1 : i32
    %0 = arith.muli %arg0, %c1_i32 : i32
    %1 = arith.addi %0, %arg1 : i32
    %c0_i32 = arith.constant 0 : i32
    %c0_i32_0 = arith.constant 0 : i32
    return %1, %c0_i32 : i32, i32
  }
  func.func @transform_1(%arg0: i32, %arg1: i32) -> (i32, i32, i32) {
    %c0_i32 = arith.constant 0 : i32
    %c0_i32_0 = arith.constant 0 : i32
    %c0_i32_1 = arith.constant 0 : i32
    return %arg0, %c0_i32, %c0_i32_0 : i32, i32, i32
  }
  func.func @transform_2(%arg0: i32, %arg1: i32) -> (i32, i32, i32) {
    %c0_i32 = arith.constant 0 : i32
    %c0_i32_0 = arith.constant 0 : i32
    %c0_i32_1 = arith.constant 0 : i32
    return %arg0, %c0_i32, %c0_i32_0 : i32, i32, i32
  }
}

module attributes {stable_mosaic.version = 11 : i64} {
  func.func @_norm_kernel(%arg0: i32, %arg1: memref<1x256xf32, #tpu.memory_space<vmem>>, %arg2: memref<1x256xf32, #tpu.memory_space<vmem>>, %arg3: memref<1x256xf32, #tpu.memory_space<vmem>>, %arg4: memref<1x256xf32, #tpu.memory_space<vmem>>) attributes {dimension_semantics = [#tpu.dimension_semantics<parallel>], iteration_bounds = array<i64: 1>, scalar_prefetch = 0 : i64, scratch_operands = 0 : i64, tpu.core_type = #tpu.core_type<tc>, window_params = [{transform_indices = @transform_0, window_bounds = array<i64: 1, 256>}, {pipeline_mode = #tpu.pipeline_mode<synchronous>, transform_indices = @transform_1, window_bounds = array<i64: 1, 256>}, {pipeline_mode = #tpu.pipeline_mode<synchronous>, transform_indices = @transform_2, window_bounds = array<i64: 1, 256>}, {transform_indices = @transform_3, window_bounds = array<i64: 1, 256>}]} {
    %c0 = arith.constant 0 : index
    %c0_0 = arith.constant 0 : index
    %0 = vector.load %arg1[%c0, %c0_0] : memref<1x256xf32, #tpu.memory_space<vmem>>, vector<1x256xf32>
    %c0_1 = arith.constant 0 : index
    %c0_2 = arith.constant 0 : index
    %1 = vector.load %arg2[%c0_1, %c0_2] : memref<1x256xf32, #tpu.memory_space<vmem>>, vector<1x256xf32>
    %2 = arith.mulf %0, %1 : vector<1x256xf32>
    %c0_3 = arith.constant 0 : index
    %c0_4 = arith.constant 0 : index
    %3 = vector.load %arg3[%c0_3, %c0_4] : memref<1x256xf32, #tpu.memory_space<vmem>>, vector<1x256xf32>
    %4 = arith.addf %2, %3 : vector<1x256xf32>
    %c0_5 = arith.constant 0 : index
    %c0_6 = arith.constant 0 : index
    %5 = vector.load %arg4[%c0_5, %c0_6] : memref<1x256xf32, #tpu.memory_space<vmem>>, vector<1x256xf32>
    tpu.vector_store %arg4[%c0_5, %c0_6], %4 {strides = array<i32>} : memref<1x256xf32, #tpu.memory_space<vmem>>, vector<1x256xf32>,
    return
  }
  func.func @transform_0(%arg0: i32) -> (i32, i32) {
    %c0_i32 = arith.constant 0 : i32
    %c0_i32_0 = arith.constant 0 : i32
    return %arg0, %c0_i32 : i32, i32
  }
  func.func @transform_1(%arg0: i32) -> (i32, i32) {
    %c0_i32 = arith.constant 0 : i32
    %c0_i32_0 = arith.constant 0 : i32
    %c0_i32_1 = arith.constant 0 : i32
    return %c0_i32, %c0_i32_0 : i32, i32
  }
  func.func @transform_2(%arg0: i32) -> (i32, i32) {
    %c0_i32 = arith.constant 0 : i32
    %c0_i32_0 = arith.constant 0 : i32
    %c0_i32_1 = arith.constant 0 : i32
    return %c0_i32, %c0_i32_0 : i32, i32
  }
  func.func @transform_3(%arg0: i32) -> (i32, i32) {
    %c0_i32 = arith.constant 0 : i32
    %c0_i32_0 = arith.constant 0 : i32
    return %arg0, %c0_i32 : i32, i32
  }
}

</mosaic_0001>

<llo_original>
// kernel: spike_batchnorm.2
$region0: #{spike_batchnorm.2}
  #allocation0 [shape = 'u32[]', space=smem, size = 0x4, offset = 0x4, fixed_abs, tag = 'smem constant byte address 0x4 - core index']
  #allocation1 [shape = 'u32[144,128]{1,0:T(1,128)}', space=vmem, size = 0x12000, scoped, tag = 'internal scratch']
  %s0 = inlined_call_operand.vmem [shape: f32[1,256], index: 0, kind: input, shape index: {}]
  %s1 = inlined_call_operand.vmem [shape: f32[1,8,256], index: 1, kind: output, shape index: {0}]
  %s2 = inlined_call_operand.vmem [shape: f32[1,8,256], index: 2, kind: output, shape index: {1}]
  %3 = xla_tuple %s1, %s2
  %s4 = sld [smem:[#allocation0]]
  $region26: #{spike_batchnorm.2} parent=0
    _
  %s6 = ssub.s32 1, %s4
  %s7 = scalar_select 0, %s6, %s4
  // Predicated region
  $region2: #{spike_batchnorm.2} parent=0 // pred_check
    _
  $region3: #{spike_batchnorm.2} parent=0 // pred_check_branch
    %9 = sbr.rel (0) target = $region5
  $region4: #{spike_batchnorm.2} parent=0 // pred_region
    %s10 = sadd.s32 0, 0
    %p11 = scmp.lt.s32.totalorder %s10, 0
    %s12 = scalar_select %p11, %s10, 0
    %s13 = smul.addr %s12, 2
    %s14 = scalar_lea.vmem %s0, %s13
    %s15 = sadd.s32 0, 0
  $region5: #{spike_batchnorm.2} parent=0 // pred_fallthru
    _
  %s16 = sadd.s32 0, 0
  %p17 = scmp.lt.s32.totalorder %s16, 0
  %s18 = scalar_select %p17, %s16, 0
  %s19 = smul.addr %s18, 2
  %s20 = scalar_lea.vmem %s0, %s19
  %s21 = sadd.s32 0, 0
  %p22 = scmp.lt.s32.totalorder %s21, 0
  %s23 = scalar_select %p22, %s21, 0
  %s24 = smul.addr %s23, 2
  %s25 = scalar_lea.vmem %s0, %s24
  %s26 = sadd.s32 0, 0
  %p27 = scmp.eq.s32.totalorder 0, 0
  // Predicated region
  $region6: #{spike_batchnorm.2} parent=0 // pred_check
    %p28 = pneg %p27
  $region7: #{spike_batchnorm.2} parent=0 // pred_check_branch
    %30 = sbr.rel (%p28) target = $region9
  $region8: #{spike_batchnorm.2} parent=0 // pred_region
    %31 = vst [vmem:[%s1] sm:$0xff] 0.0
    %32 = vst [vmem:[%s1 + $0x8] sm:$0xff] 0.0
    %33 = vst [vmem:[%s2] sm:$0xff] 0.0
    %34 = vst [vmem:[%s2 + $0x8] sm:$0xff] 0.0
  $region9: #{spike_batchnorm.2} parent=0 // pred_fallthru
    _
  %v35 = vld [vmem:[%s25] sm:$0x3]
  %v36 = vld [vmem:[%s1] ss:$8 sm:$0x3]
  %v37 = vadd.f32 %v35, 0.0
  %v38 = vadd.f32 %v36, %v37
  %v39 = vlaneseq
  %vm40 = vcmp.ge.s32.totalorder %v39, 0
  %vm41 = vcmp.lt.s32.totalorder %v39, 256
  %vm42 = vmand %vm40, %vm41
  %43 = vst.msk [vmem:[%s1] ss:$8 sm:$0x3] %vm42, %v38
  %44 = vst.msk [vmem:[%s1] ss:$8 sm:$0x0] %vm42, %v38
  %v45 = vld [vmem:[%s2] ss:$8 sm:$0x3]
  %v46 = vmul.f32 %v35, %v35
  %v47 = vadd.f32 %v46, 0.0
  %v48 = vadd.f32 %v45, %v47
  %49 = vst.msk [vmem:[%s2] ss:$8 sm:$0x3] %vm42, %v48
  %50 = vst.msk [vmem:[%s2] ss:$8 sm:$0x0] %vm42, %v48
  // Predicated region
  $region10: #{spike_batchnorm.2} parent=0 // pred_check
    _
  $region11: #{spike_batchnorm.2} parent=0 // pred_check_branch
    %52 = sbr.rel (0) target = $region13
  $region12: #{spike_batchnorm.2} parent=0 // pred_region
    _
  $region13: #{spike_batchnorm.2} parent=0 // pred_fallthru
    _
  // Predicated region
  $region14: #{spike_batchnorm.2} parent=0 // pred_check
    _
  $region15: #{spike_batchnorm.2} parent=0 // pred_check_branch
    %54 = sbr.rel (0) target = $region17
  $region16: #{spike_batchnorm.2} parent=0 // pred_region
    _
  $region17: #{spike_batchnorm.2} parent=0 // pred_fallthru
    _
  // Predicated region
  $region18: #{spike_batchnorm.2} parent=0 // pred_check
    _
  $region19: #{spike_batchnorm.2} parent=0 // pred_check_branch
    %56 = sbr.rel (0) target = $region21
  $region20: #{spike_batchnorm.2} parent=0 // pred_region
    _
  $region21: #{spike_batchnorm.2} parent=0 // pred_fallthru
    _
  // Predicated region
  $region22: #{spike_batchnorm.2} parent=0 // pred_check
    _
  $region23: #{spike_batchnorm.2} parent=0 // pred_check_branch
    %58 = sbr.rel (0) target = $region25
  $region24: #{spike_batchnorm.2} parent=0 // pred_region
    _
  $region25: #{spike_batchnorm.2} parent=0 // pred_fallthru
    _

// kernel: spike_batchnorm.3
$region0: #{spike_batchnorm.3}
  #allocation0 [shape = 'u32[]', space=smem, size = 0x4, offset = 0x4, fixed_abs, tag = 'smem constant byte address 0x4 - core index']
  #allocation1 [shape = 'u32[144,128]{1,0:T(1,128)}', space=vmem, size = 0x12000, scoped, tag = 'internal scratch']
  %s0 = inlined_call_operand.vmem [shape: f32[1,256], index: 0, kind: input, shape index: {}]
  %s1 = inlined_call_operand.vmem [shape: f32[1,256], index: 1, kind: input, shape index: {}]
  %s2 = inlined_call_operand.vmem [shape: f32[1,256], index: 2, kind: input, shape index: {}]
  %s3 = inlined_call_operand.vmem [shape: f32[1,256], index: 3, kind: output, shape index: {}]
  %s4 = sld [smem:[#allocation0]]
  $region22: #{spike_batchnorm.3} parent=0
    _
  %s6 = ssub.s32 1, %s4
  %s7 = scalar_select 0, %s6, %s4
  // Predicated region
  $region2: #{spike_batchnorm.3} parent=0 // pred_check
    _
  $region3: #{spike_batchnorm.3} parent=0 // pred_check_branch
    %9 = sbr.rel (0) target = $region5
  $region4: #{spike_batchnorm.3} parent=0 // pred_region
    _
  $region5: #{spike_batchnorm.3} parent=0 // pred_fallthru
    _
  // Predicated region
  $region6: #{spike_batchnorm.3} parent=0 // pred_check
    _
  $region7: #{spike_batchnorm.3} parent=0 // pred_check_branch
    %11 = sbr.rel (0) target = $region9
  $region8: #{spike_batchnorm.3} parent=0 // pred_region
    _
  $region9: #{spike_batchnorm.3} parent=0 // pred_fallthru
    _
  // Predicated region
  $region10: #{spike_batchnorm.3} parent=0 // pred_check
    _
  $region11: #{spike_batchnorm.3} parent=0 // pred_check_branch
    %13 = sbr.rel (0) target = $region13
  $region12: #{spike_batchnorm.3} parent=0 // pred_region
    _
  $region13: #{spike_batchnorm.3} parent=0 // pred_fallthru
    _
  %v14 = vld [vmem:[%s0] sm:$0x3]
  %v15 = vld [vmem:[%s1] sm:$0x3]
  %v16 = vmul.f32 %v14, %v15
  %v17 = vld [vmem:[%s2] sm:$0x3]
  %v18 = vadd.f32 %v16, %v17
  %v19 = vlaneseq
  %vm20 = vcmp.ge.s32.totalorder %v19, 0
  %vm21 = vcmp.lt.s32.totalorder %v19, 256
  %vm22 = vmand %vm20, %vm21
  %23 = vst.msk [vmem:[%s3] sm:$0x3] %vm22, %v18
  // Predicated region
  $region14: #{spike_batchnorm.3} parent=0 // pred_check
    _
  $region15: #{spike_batchnorm.3} parent=0 // pred_check_branch
    %25 = sbr.rel (0) target = $region17
  $region16: #{spike_batchnorm.3} parent=0 // pred_region
    _
  $region17: #{spike_batchnorm.3} parent=0 // pred_fallthru
    _
  // Predicated region
  $region18: #{spike_batchnorm.3} parent=0 // pred_check
    _
  $region19: #{spike_batchnorm.3} parent=0 // pred_check_branch
    %27 = sbr.rel (0) target = $region21
  $region20: #{spike_batchnorm.3} parent=0 // pred_region
    _
  $region21: #{spike_batchnorm.3} parent=0 // pred_fallthru
    _

</llo_original>
